<compile_context>
chip_gen: v6e
topology: v6e:2x2x1
jax: 0.10.0
libtpu: 0.0.40
codegen_flags: <defaults>
</compile_context>

<pallas_src>
import jax
import jax.numpy as jnp
from jax.experimental import pallas as pl
from jax.experimental.pallas import tpu as pltpu


# ---------------------------------------------------------------------------
# Model hyper-parameters (small, consistent with the module's __init__).
# ---------------------------------------------------------------------------
T_BITS        = 8
T_BITS_HIDDEN = 16
T_BITS_LAYERS = 2
VOCAB_LEN     = 32
EMBED_DIM     = 16
HIDDEN_DIM    = 32
HIDDEN_ADD    = 8
OUTPUT_DIM    = 16
NUM_LAYERS    = 2
INPUT_DIM     = 0          # forward is called without input_embedding

BATCH = 2
SEQ   = 8

PACK_LANES = 128           # lane width of the packed parameter slabs
MAX_TILE_N = 2048          # token rows per grid step (review: 2048-4096)


def _round_up(x, m):
    return (x + m - 1) // m * m


# ---------------------------------------------------------------------------
# Static packed-parameter layout.
# Weights: row-packed into one (W_ROWS, 128) bf16 slab; block row offsets are
# multiples of 16 so static slices respect the bf16 (16, 128) sublane packing.
#   * "wt1" is widened to output width 32: real weights in cols 0..15,
#     cols 16..31 zero.
#   * "emb" is widened to output width 32: embedding in cols 16..31,
#     cols 0..15 zero.
#   => t + e reproduces concat(t, e) with no lane-axis concatenate.
# ---------------------------------------------------------------------------
_FC_IN = T_BITS_HIDDEN + INPUT_DIM + EMBED_DIM          # 32

_W_DEFS = (
    ("emb", VOCAB_LEN, _FC_IN),                          # (32, 32) widened
    ("wt0", T_BITS, T_BITS_HIDDEN),                      # (8, 16)
    ("wt1", T_BITS_HIDDEN, _FC_IN),                      # (16, 32) widened
    ("wi",  _FC_IN, HIDDEN_DIM),                         # (32, 32)
    ("w0",  HIDDEN_DIM, HIDDEN_DIM + HIDDEN_ADD),        # (32, 40)
    ("w1",  HIDDEN_DIM + HIDDEN_ADD, HIDDEN_DIM + 2 * HIDDEN_ADD),   # (40, 48)
    ("wo",  HIDDEN_DIM + NUM_LAYERS * HIDDEN_ADD, OUTPUT_DIM),       # (48, 16)
)


def _build_w_layout():
    layout, row = {}, 0
    for name, r, c in _W_DEFS:
        layout[name] = (row, r, c)
        row += _round_up(r, 16)      # 16-row alignment: bf16 sublane pack (16,128)
    return layout, _round_up(row, 16)


W_LAYOUT, W_ROWS = _build_w_layout()        # W_ROWS = 224

# Biases: one per sublane of an (8, 128) f32 slab. Widths match the (widened)
# matmul output widths; unused columns are zero.
_B_DEFS = (
    ("bt0", T_BITS_HIDDEN),
    ("bt1", _FC_IN),                        # real bias in cols 0..15, rest zero
    ("bi",  HIDDEN_DIM),
    ("b0",  HIDDEN_DIM + HIDDEN_ADD),
    ("b1",  HIDDEN_DIM + 2 * HIDDEN_ADD),
    ("bo",  OUTPUT_DIM),
)
B_LAYOUT = {name: (i, c) for i, (name, c) in enumerate(_B_DEFS)}
B_ROWS = 8


# ---------------------------------------------------------------------------
# Kernel: one grid step processes a (TN, *) tile of tokens through the whole
# stack of matmuls. Parameter slabs are VMEM-resident (constant index_map).
# ---------------------------------------------------------------------------
def _seq_embedding_kernel(t_ref, idx_ref, w_ref, b_ref, o_ref):
    f32, bf16 = jnp.float32, jnp.bfloat16

    def weight(name):                        # static slice of the bf16 slab
        row, r, c = W_LAYOUT[name]
        return w_ref[row:row + r, 0:c]

    b_all = b_ref[...]                       # (8, 128) f32, single load

    def bias(name):
        i, c = B_LAYOUT[name]
        return b_all[i:i + 1, 0:c]           # (1, c), broadcasts over rows

    def dense(x, wname, bname, relu=True):
        # MXU push in bf16, accumulate f32, bias+ReLU in f32, then keep the
        # inter-layer activation in bf16 (single cast, needed for the next
        # MXU push anyway; halves activation vregs / VMEM traffic).
        y = jnp.dot(x.astype(bf16), weight(wname),
                    preferred_element_type=f32) + bias(bname)
        if relu:
            y = jnp.maximum(y, 0.0)
        return y.astype(bf16)

    # ---- t_seq branch: Linear + ReLU stack --------------------------------
    t = t_ref[...]                                            # (TN, 8) bf16
    t = dense(t, "wt0", "bt0")                                # (TN, 16)
    t = dense(t, "wt1", "bt1")                                # (TN, 32), cols 16..31 == 0

    # ---- embedding lookup via one-hot matmul (MXU) -------------------------
    ids = idx_ref[...]                                        # (TN, 1) int32
    iota = jax.lax.broadcasted_iota(jnp.int32, (ids.shape[0], VOCAB_LEN), 1)
    onehot = (iota == ids).astype(bf16)                       # (TN, vocab)
    e = jnp.dot(onehot, weight("emb"),
                preferred_element_type=f32)                   # (TN, 32), cols 0..15 == 0

    # ---- fc_input: add replaces lane-axis concat (slab column placement) ---
    x = (t + e).astype(bf16)                                  # == concat(t, e)
    x = dense(x, "wi", "bi", relu=False)                      # (TN, 32)

    # ---- hidden layers (Linear + ReLU), growing width -----------------------
    x = dense(x, "w0", "b0")                                  # (TN, 40)
    x = dense(x, "w1", "b1")                                  # (TN, 48)

    # ---- fc_output + ReLU ----------------------------------------------------
    x = dense(x, "wo", "bo")                                  # (TN, 16)

    o_ref[...] = x.astype(o_ref.dtype)


# ---------------------------------------------------------------------------
# Wrapper: flatten tokens, pad to the tile size, run the grid.
# ---------------------------------------------------------------------------
def seq_embedding_forward(t_seq, one_hot, params):
    """t_seq: (B, S, t_bits); one_hot: (B, S) int32 -> (B, S, output_dim) f32."""
    B, S, tb = t_seq.shape
    assert tb == T_BITS
    N = B * S

    # >= 2 grid steps (so v7x's two TCs both get work), capped at MAX_TILE_N
    # so large N amortizes the per-step grid overhead.
    tile_n = min(MAX_TILE_N, max(8, _round_up(pl.cdiv(N, 2), 8)))
    n_pad = _round_up(N, tile_n)
    grid = (pl.cdiv(n_pad, tile_n),)

    t_flat = t_seq.reshape(N, tb).astype(jnp.bfloat16)     # bf16 input DMA
    idx_flat = one_hot.reshape(N, 1).astype(jnp.int32)
    if n_pad != N:
        t_flat = jnp.pad(t_flat, ((0, n_pad - N), (0, 0)))
        idx_flat = jnp.pad(idx_flat, ((0, n_pad - N), (0, 0)))

    out = pl.pallas_call(
        _seq_embedding_kernel,
        out_shape=jax.ShapeDtypeStruct((n_pad, OUTPUT_DIM), jnp.float32),
        grid=grid,
        in_specs=[
            # per-step activation tiles
            pl.BlockSpec((tile_n, T_BITS), lambda i: (i, 0)),
            pl.BlockSpec((tile_n, 1), lambda i: (i, 0)),
            # parameter slabs: constant index_map -> fetched once, VMEM-resident
            pl.BlockSpec((W_ROWS, PACK_LANES), lambda i: (0, 0)),
            pl.BlockSpec((B_ROWS, PACK_LANES), lambda i: (0, 0)),
        ],
        out_specs=pl.BlockSpec((tile_n, OUTPUT_DIM), lambda i: (i, 0)),
        compiler_params=pltpu.CompilerParams(
            dimension_semantics=("parallel",)),   # shard N across v7x's 2 TCs
    )(t_flat, idx_flat, params["w_pack"], params["b_pack"])

    return out[:N].reshape(B, S, OUTPUT_DIM)


# ---------------------------------------------------------------------------
# Deterministic parameter init (PyTorch-style uniform(-1/sqrt(fan_in), ...)),
# weights stored transposed (in_features, out_features), packed into slabs.
# ---------------------------------------------------------------------------
def init_params(key):
    def linear(key, fan_in, fan_out):
        kw, kb = jax.random.split(key)
        bound = 1.0 / jnp.sqrt(fan_in)
        w = jax.random.uniform(kw, (fan_in, fan_out), jnp.float32, -bound, bound)
        b = jax.random.uniform(kb, (fan_out,), jnp.float32, -bound, bound)
        return w, b

    keys = jax.random.split(key, 8)

    # Embedding table; padding_idx=-1 -> row VOCAB_LEN-1 zeroed (as in PyTorch).
    emb = jax.random.normal(keys[0], (VOCAB_LEN, EMBED_DIM), jnp.float32)
    emb = emb.at[VOCAB_LEN - 1].set(0.0)

    wt0, bt0 = linear(keys[1], T_BITS, T_BITS_HIDDEN)
    wt1, bt1 = linear(keys[2], T_BITS_HIDDEN, T_BITS_HIDDEN)
    wi,  bi  = linear(keys[3], _FC_IN, HIDDEN_DIM)
    w0,  b0  = linear(keys[4], HIDDEN_DIM, HIDDEN_DIM + HIDDEN_ADD)
    w1,  b1  = linear(keys[5], HIDDEN_DIM + HIDDEN_ADD, HIDDEN_DIM + 2 * HIDDEN_ADD)
    wo,  bo  = linear(keys[6], HIDDEN_DIM + NUM_LAYERS * HIDDEN_ADD, OUTPUT_DIM)

    weights = dict(emb=emb, wt0=wt0, wt1=wt1, wi=wi, w0=w0, w1=w1, wo=wo)
    biases  = dict(bt0=bt0, bt1=bt1, bi=bi, b0=b0, b1=b1, bo=bo)

    # Packed bf16 weight slab (16-row aligned blocks).
    def _place(slab, name, mat, col=0):
        row = W_LAYOUT[name][0]
        return slab.at[row:row + mat.shape[0],
                       col:col + mat.shape[1]].set(mat.astype(jnp.bfloat16))

    w_pack = jnp.zeros((W_ROWS, PACK_LANES), jnp.bfloat16)
    w_pack = _place(w_pack, "emb", emb, col=T_BITS_HIDDEN)   # cols 16..31
    w_pack = _place(w_pack, "wt0", wt0)
    w_pack = _place(w_pack, "wt1", wt1)                      # cols 0..15
    w_pack = _place(w_pack, "wi",  wi)
    w_pack = _place(w_pack, "w0",  w0)
    w_pack = _place(w_pack, "w1",  w1)
    w_pack = _place(w_pack, "wo",  wo)

    # Packed f32 bias slab (one bias per sublane; unused cols stay zero).
    b_pack = jnp.zeros((B_ROWS, PACK_LANES), jnp.float32)
    for name, (i, _) in B_LAYOUT.items():
        b = biases[name]
        b_pack = b_pack.at[i, 0:b.shape[0]].set(b)

    # bf16-quantized copies for the pure-JAX reference (same numerics).
    ref_w = {k: v.astype(jnp.bfloat16) for k, v in weights.items()}

    return dict(w_pack=w_pack, b_pack=b_pack, ref_w=ref_w, ref_b=biases)


# ---------------------------------------------------------------------------
# Pure-JAX reference mirroring the PyTorch forward with the same bf16 weight
# quantization, bf16 MXU inputs + f32 accumulation, and bf16 inter-layer
# activations as the kernel.
# ---------------------------------------------------------------------------
def reference_forward(t_seq, one_hot, params):
    f32, bf16 = jnp.float32, jnp.bfloat16
    w, b = params["ref_w"], params["ref_b"]

    def dense(x, wname, bname, relu=True):
        y = jnp.dot(x.astype(bf16), w[wname],
                    preferred_element_type=f32) + b[bname]
        if relu:
            y = jnp.maximum(y, 0.0)
        return y.astype(bf16)

    e = w["emb"].astype(f32)[one_hot]                     # (B, S, emb)
    t = dense(t_seq.astype(bf16), "wt0", "bt0")
    t = dense(t, "wt1", "bt1")
    x = jnp.concatenate((t.astype(f32), e), axis=-1)
    x = dense(x, "wi", "bi", relu=False)
    x = dense(x, "w0", "b0")
    x = dense(x, "w1", "b1")
    x = dense(x, "wo", "bo")
    return x.astype(f32)


if __name__ == "__main__":
    key = jax.random.PRNGKey(0)
    k_t, k_id, k_p = jax.random.split(key, 3)

    t_seq = jax.random.normal(k_t, (BATCH, SEQ, T_BITS), jnp.float32)
    one_hot = jax.random.randint(k_id, (BATCH, SEQ), 0, VOCAB_LEN, jnp.int32)
    params = init_params(k_p)

    out = jax.block_until_ready(seq_embedding_forward(t_seq, one_hot, params))
    ref = reference_forward(t_seq, one_hot, params)

    assert out.shape == (BATCH, SEQ, OUTPUT_DIM)
    # Kernel and reference share identical bf16 weight / activation quantization,
    # so any residual difference is only MXU accumulation-order noise.
    assert jnp.allclose(out, ref, atol=1e-2, rtol=1e-2), (
        "max abs err = %g" % float(jnp.max(jnp.abs(out - ref))))

    print("KERNEL_OK")
</pallas_src>

<mosaic_0001>
module attributes {stable_mosaic.version = 11 : i64} {
  func.func @_seq_embedding_kernel(%arg0: i32, %arg1: memref<8x8xbf16, #tpu.memory_space<vmem>>, %arg2: memref<8x1xi32, #tpu.memory_space<vmem>>, %arg3: memref<224x128xbf16, #tpu.memory_space<vmem>>, %arg4: memref<8x128xf32, #tpu.memory_space<vmem>>, %arg5: memref<8x16xf32, #tpu.memory_space<vmem>>) attributes {dimension_semantics = [#tpu.dimension_semantics<parallel>], iteration_bounds = array<i64: 2>, scalar_prefetch = 0 : i64, scratch_operands = 0 : i64, tpu.core_type = #tpu.core_type<tc>, window_params = [{transform_indices = @transform_0, window_bounds = array<i64: 8, 8>}, {transform_indices = @transform_1, window_bounds = array<i64: 8, 1>}, {pipeline_mode = #tpu.pipeline_mode<synchronous>, transform_indices = @transform_2, window_bounds = array<i64: 224, 128>}, {pipeline_mode = #tpu.pipeline_mode<synchronous>, transform_indices = @transform_3, window_bounds = array<i64: 8, 128>}, {transform_indices = @transform_4, window_bounds = array<i64: 8, 16>}]} {
    %c0 = arith.constant 0 : index
    %c0_0 = arith.constant 0 : index
    %0 = vector.load %arg4[%c0, %c0_0] : memref<8x128xf32, #tpu.memory_space<vmem>>, vector<8x128xf32>
    %c0_1 = arith.constant 0 : index
    %c0_2 = arith.constant 0 : index
    %1 = vector.load %arg1[%c0_1, %c0_2] : memref<8x8xbf16, #tpu.memory_space<vmem>>, vector<8x8xbf16>
    %c32 = arith.constant 32 : index
    %c0_3 = arith.constant 0 : index
    %2 = vector.load %arg3[%c32, %c0_3] : memref<224x128xbf16, #tpu.memory_space<vmem>>, vector<8x16xbf16>
    %cst = arith.constant dense<0.000000e+00> : vector<8x16xf32>
    %3 = tpu.matmul %1, %2, %cst {dimension_numbers = #tpu.dot_dimension_numbers<[1], [0], [0], [1], [0, 0, 1, 1], [], []>} : vector<8x8xbf16>, vector<8x16xbf16>, vector<8x16xf32> -> vector<8x16xf32>
    %4 = vector.extract_strided_slice %0 {offsets = [0, 0], sizes = [1, 16], strides = [1, 1]} : vector<8x128xf32> to vector<1x16xf32>
    %5 = vector.broadcast %4 : vector<1x16xf32> to vector<8x16xf32>
    %6 = arith.addf %3, %5 : vector<8x16xf32>
    %cst_4 = arith.constant 0.000000e+00 : f32
    %7 = vector.broadcast %cst_4 : f32 to vector<8x16xf32>
    %8 = arith.maximumf %6, %7 : vector<8x16xf32>
    %9 = arith.truncf %8 : vector<8x16xf32> to vector<8x16xbf16>
    %c48 = arith.constant 48 : index
    %c0_5 = arith.constant 0 : index
    %10 = vector.load %arg3[%c48, %c0_5] : memref<224x128xbf16, #tpu.memory_space<vmem>>, vector<16x32xbf16>
    %cst_6 = arith.constant dense<0.000000e+00> : vector<8x32xf32>
    %11 = tpu.matmul %9, %10, %cst_6 {dimension_numbers = #tpu.dot_dimension_numbers<[1], [0], [0], [1], [0, 0, 1, 1], [], []>} : vector<8x16xbf16>, vector<16x32xbf16>, vector<8x32xf32> -> vector<8x32xf32>
    %12 = vector.extract_strided_slice %0 {offsets = [1, 0], sizes = [1, 32], strides = [1, 1]} : vector<8x128xf32> to vector<1x32xf32>
    %13 = vector.broadcast %12 : vector<1x32xf32> to vector<8x32xf32>
    %14 = arith.addf %11, %13 : vector<8x32xf32>
    %cst_7 = arith.constant 0.000000e+00 : f32
    %15 = vector.broadcast %cst_7 : f32 to vector<8x32xf32>
    %16 = arith.maximumf %14, %15 : vector<8x32xf32>
    %17 = arith.truncf %16 : vector<8x32xf32> to vector<8x32xbf16>
    %c0_8 = arith.constant 0 : index
    %c0_9 = arith.constant 0 : index
    %18 = vector.load %arg2[%c0_8, %c0_9] : memref<8x1xi32, #tpu.memory_space<vmem>>, vector<8x1xi32>
    %19 = tpu.iota {dimensions = array<i32: 1>} : vector<8x32xi32>
    %20 = vector.broadcast %18 : vector<8x1xi32> to vector<8x32xi32>
    %21 = arith.cmpi eq, %19, %20 : vector<8x32xi32>
    %22 = arith.extui %21 : vector<8x32xi1> to vector<8x32xi32>
    %23 = arith.sitofp %22 : vector<8x32xi32> to vector<8x32xf32>
    %24 = arith.truncf %23 : vector<8x32xf32> to vector<8x32xbf16>
    %c0_10 = arith.constant 0 : index
    %c0_11 = arith.constant 0 : index
    %25 = vector.load %arg3[%c0_10, %c0_11] : memref<224x128xbf16, #tpu.memory_space<vmem>>, vector<32x32xbf16>
    %cst_12 = arith.constant dense<0.000000e+00> : vector<8x32xf32>
    %26 = tpu.matmul %24, %25, %cst_12 {dimension_numbers = #tpu.dot_dimension_numbers<[1], [0], [0], [1], [0, 0, 1, 1], [], []>} : vector<8x32xbf16>, vector<32x32xbf16>, vector<8x32xf32> -> vector<8x32xf32>
    %27 = arith.extf %17 : vector<8x32xbf16> to vector<8x32xf32>
    %28 = arith.addf %27, %26 : vector<8x32xf32>
    %29 = arith.truncf %28 : vector<8x32xf32> to vector<8x32xbf16>
    %c64 = arith.constant 64 : index
    %c0_13 = arith.constant 0 : index
    %30 = vector.load %arg3[%c64, %c0_13] : memref<224x128xbf16, #tpu.memory_space<vmem>>, vector<32x32xbf16>
    %cst_14 = arith.constant dense<0.000000e+00> : vector<8x32xf32>
    %31 = tpu.matmul %29, %30, %cst_14 {dimension_numbers = #tpu.dot_dimension_numbers<[1], [0], [0], [1], [0, 0, 1, 1], [], []>} : vector<8x32xbf16>, vector<32x32xbf16>, vector<8x32xf32> -> vector<8x32xf32>
    %32 = vector.extract_strided_slice %0 {offsets = [2, 0], sizes = [1, 32], strides = [1, 1]} : vector<8x128xf32> to vector<1x32xf32>
    %33 = vector.broadcast %32 : vector<1x32xf32> to vector<8x32xf32>
    %34 = arith.addf %31, %33 : vector<8x32xf32>
    %35 = arith.truncf %34 : vector<8x32xf32> to vector<8x32xbf16>
    %c96 = arith.constant 96 : index
    %c0_15 = arith.constant 0 : index
    %36 = vector.load %arg3[%c96, %c0_15] : memref<224x128xbf16, #tpu.memory_space<vmem>>, vector<32x40xbf16>
    %cst_16 = arith.constant dense<0.000000e+00> : vector<8x40xf32>
    %37 = tpu.matmul %35, %36, %cst_16 {dimension_numbers = #tpu.dot_dimension_numbers<[1], [0], [0], [1], [0, 0, 1, 1], [], []>} : vector<8x32xbf16>, vector<32x40xbf16>, vector<8x40xf32> -> vector<8x40xf32>
    %38 = vector.extract_strided_slice %0 {offsets = [3, 0], sizes = [1, 40], strides = [1, 1]} : vector<8x128xf32> to vector<1x40xf32>
    %39 = vector.broadcast %38 : vector<1x40xf32> to vector<8x40xf32>
    %40 = arith.addf %37, %39 : vector<8x40xf32>
    %cst_17 = arith.constant 0.000000e+00 : f32
    %41 = vector.broadcast %cst_17 : f32 to vector<8x40xf32>
    %42 = arith.maximumf %40, %41 : vector<8x40xf32>
    %43 = arith.truncf %42 : vector<8x40xf32> to vector<8x40xbf16>
    %c128 = arith.constant 128 : index
    %c0_18 = arith.constant 0 : index
    %44 = vector.load %arg3[%c128, %c0_18] : memref<224x128xbf16, #tpu.memory_space<vmem>>, vector<40x48xbf16>
    %cst_19 = arith.constant dense<0.000000e+00> : vector<8x48xf32>
    %45 = tpu.matmul %43, %44, %cst_19 {dimension_numbers = #tpu.dot_dimension_numbers<[1], [0], [0], [1], [0, 0, 1, 1], [], []>} : vector<8x40xbf16>, vector<40x48xbf16>, vector<8x48xf32> -> vector<8x48xf32>
    %46 = vector.extract_strided_slice %0 {offsets = [4, 0], sizes = [1, 48], strides = [1, 1]} : vector<8x128xf32> to vector<1x48xf32>
    %47 = vector.broadcast %46 : vector<1x48xf32> to vector<8x48xf32>
    %48 = arith.addf %45, %47 : vector<8x48xf32>
    %cst_20 = arith.constant 0.000000e+00 : f32
    %49 = vector.broadcast %cst_20 : f32 to vector<8x48xf32>
    %50 = arith.maximumf %48, %49 : vector<8x48xf32>
    %51 = arith.truncf %50 : vector<8x48xf32> to vector<8x48xbf16>
    %c176 = arith.constant 176 : index
    %c0_21 = arith.constant 0 : index
    %52 = vector.load %arg3[%c176, %c0_21] : memref<224x128xbf16, #tpu.memory_space<vmem>>, vector<48x16xbf16>
    %cst_22 = arith.constant dense<0.000000e+00> : vector<8x16xf32>
    %53 = tpu.matmul %51, %52, %cst_22 {dimension_numbers = #tpu.dot_dimension_numbers<[1], [0], [0], [1], [0, 0, 1, 1], [], []>} : vector<8x48xbf16>, vector<48x16xbf16>, vector<8x16xf32> -> vector<8x16xf32>
    %54 = vector.extract_strided_slice %0 {offsets = [5, 0], sizes = [1, 16], strides = [1, 1]} : vector<8x128xf32> to vector<1x16xf32>
    %55 = vector.broadcast %54 : vector<1x16xf32> to vector<8x16xf32>
    %56 = arith.addf %53, %55 : vector<8x16xf32>
    %cst_23 = arith.constant 0.000000e+00 : f32
    %57 = vector.broadcast %cst_23 : f32 to vector<8x16xf32>
    %58 = arith.maximumf %56, %57 : vector<8x16xf32>
    %59 = arith.truncf %58 : vector<8x16xf32> to vector<8x16xbf16>
    %60 = arith.extf %59 : vector<8x16xbf16> to vector<8x16xf32>
    %c0_24 = arith.constant 0 : index
    %c0_25 = arith.constant 0 : index
    %61 = vector.load %arg5[%c0_24, %c0_25] : memref<8x16xf32, #tpu.memory_space<vmem>>, vector<8x16xf32>
    tpu.vector_store %arg5[%c0_24, %c0_25], %60 {strides = array<i32>} : memref<8x16xf32, #tpu.memory_space<vmem>>, vector<8x16xf32>,
    return
  }
  func.func @transform_0(%arg0: i32) -> (i32, i32) {
    %c0_i32 = arith.constant 0 : i32
    %c0_i32_0 = arith.constant 0 : i32
    return %arg0, %c0_i32 : i32, i32
  }
  func.func @transform_1(%arg0: i32) -> (i32, i32) {
    %c0_i32 = arith.constant 0 : i32
    %c0_i32_0 = arith.constant 0 : i32
    return %arg0, %c0_i32 : i32, i32
  }
  func.func @transform_2(%arg0: i32) -> (i32, i32) {
    %c0_i32 = arith.constant 0 : i32
    %c0_i32_0 = arith.constant 0 : i32
    %c0_i32_1 = arith.constant 0 : i32
    return %c0_i32, %c0_i32_0 : i32, i32
  }
  func.func @transform_3(%arg0: i32) -> (i32, i32) {
    %c0_i32 = arith.constant 0 : i32
    %c0_i32_0 = arith.constant 0 : i32
    %c0_i32_1 = arith.constant 0 : i32
    return %c0_i32, %c0_i32_0 : i32, i32
  }
  func.func @transform_4(%arg0: i32) -> (i32, i32) {
    %c0_i32 = arith.constant 0 : i32
    %c0_i32_0 = arith.constant 0 : i32
    return %arg0, %c0_i32 : i32, i32
  }
}

</mosaic_0001>

<llo_original>
// kernel: tpu_custom_call.1
$region0: #{tpu_custom_call.1}
  #allocation0 [shape = 'u32[]', space=smem, size = 0x4, offset = 0x4, fixed_abs, tag = 'smem constant byte address 0x4 - core index']
  #allocation1 [shape = 'u32[144,128]{1,0:T(1,128)}', space=vmem, size = 0x12000, scoped, tag = 'internal scratch']
  %s0 = inlined_call_operand.vmem [shape: bf16[16,8], index: 0, kind: input, shape index: {}]
  %s1 = inlined_call_operand.vmem [shape: s32[16,1], index: 1, kind: input, shape index: {}]
  %s2 = inlined_call_operand.hbm [shape: bf16[224,128], index: 2, kind: input, shape index: {}]
  %s3 = inlined_call_operand.vmem [shape: f32[8,128], index: 3, kind: input, shape index: {}]
  %s4 = inlined_call_operand.hbm [shape: f32[16,16], index: 4, kind: output, shape index: {}]
  %s5 = sld [smem:[#allocation0]]
  $region53: #{tpu_custom_call.1} parent=0
    _
  %s7 = ssub.s32 1, %s5
  %s8 = scalar_select 0, %s7, %s5
  $region1: #{tpu_custom_call.1} parent=0
    #allocation2 [shape = 'u8[57344]{0}', space=vmem, size = 0xe000, scoped, tag = 'input window, operand 2, single buffered']
    #allocation3 [shape = 's32[2]{0}', space=sflag, size = 0x8, scoped, tag = 'scoped memory for tpu_custom_call.1']
    #allocation4 [shape = 's32[2]{0}', space=sflag, size = 0x8, scoped, tag = 'scoped memory for tpu_custom_call.1']
    #allocation5 [shape = 'u8[8192]{0}', space=vmem, size = 0x2000, scoped, tag = 'output window, operand 0']
    %9 = vsyncpa [#allocation3], 0
    %10 = vsyncpa [#allocation4], 0
    %s11 = scalar_lea.sflag [#allocation4], 1
    %12 = vsyncpa %s11, 0
    loop: start=0, step=1, limit=4
    $region2: #{tpu_custom_call.1} parent=1 // loop_pre_header
      _
    $region3: #{tpu_custom_call.1} parent=1 // loop_header
      %s14 = sphi 0, %s18
      %p15 = scmp.ge.s32.totalorder %s14, 4
      %s24 = sphi 0, %s26
      %s27 = sphi 0, %s24
      %s28 = sphi 0, %s27
      %s44 = sphi 0, %s28
      %s50 = sphi 0, %s52
      %s53 = sphi 0, %s50
      %s54 = sphi 0, %s53
      %s70 = sphi 0, %s54
      %s74 = sphi 0, %s74
      %s76 = sphi 0, %s74
      %s77 = sphi 0, %s76
      %s91 = sphi 0, %s77
      %s95 = sphi 0, %s95
      %s97 = sphi 0, %s95
      %s98 = sphi 0, %s97
      %s112 = sphi 0, %s98
      %s118 = sphi 0, %s120
      %s121 = sphi 0, %s118
      %s122 = sphi 0, %s121
      %s138 = sphi 0, %s122
    $region4: #{tpu_custom_call.1} parent=1 // loop_header_branch
      %17 = sbr.rel (%p15) target = $region8
    $region5: #{tpu_custom_call.1} parent=1 // loop_body
      %s19 = ssub.s32 %s14, 1
      %s20 = ssub.s32 %s14, 2
      %s21 = sadd.s32 %s14, 1
      %s22 = ssub.s32 %s14, %s21
      %p23 = scmp.eq.s32.totalorder %s22, 0
      %s25 = sadd.s32 %s24, 1
      %s26 = scalar_select %p23, %s24, %s25
      %p29 = pneg %p23
      %p30 = scmp.eq.s32.totalorder %s14, 1
      %p31 = por %p29, %p30
      %p32 = scmp.ne.s32.totalorder %s24, %s27
      %p33 = scmp.eq.s32.totalorder %s14, 0
      %p34 = por %p32, %p33
      %p35 = scmp.ne.s32.totalorder %s24, %s27
      %p36 = scmp.eq.s32.totalorder %s19, 1
      %p37 = por %p35, %p36
      %p38 = scmp.ne.s32.totalorder %s27, %s28
      %p39 = scmp.eq.s32.totalorder %s19, 0
      %p40 = por %p38, %p39
      %p41 = scmp.ne.s32.totalorder %s27, %s28
      %p42 = scmp.eq.s32.totalorder %s20, 1
      %p43 = por %p41, %p42
      %p45 = scmp.ne.s32.totalorder %s28, %s44
      %p46 = scmp.eq.s32.totalorder %s20, 0
      %p47 = por %p45, %p46
      %s48 = ssub.s32 %s14, %s21
      %p49 = scmp.eq.s32.totalorder %s48, 0
      %s51 = sadd.s32 %s50, 1
      %s52 = scalar_select %p49, %s50, %s51
      %p55 = pneg %p49
      %p56 = scmp.eq.s32.totalorder %s14, 1
      %p57 = por %p55, %p56
      %p58 = scmp.ne.s32.totalorder %s50, %s53
      %p59 = scmp.eq.s32.totalorder %s14, 0
      %p60 = por %p58, %p59
      %p61 = scmp.ne.s32.totalorder %s50, %s53
      %p62 = scmp.eq.s32.totalorder %s19, 1
      %p63 = por %p61, %p62
      %p64 = scmp.ne.s32.totalorder %s53, %s54
      %p65 = scmp.eq.s32.totalorder %s19, 0
      %p66 = por %p64, %p65
      %p67 = scmp.ne.s32.totalorder %s53, %s54
      %p68 = scmp.eq.s32.totalorder %s20, 1
      %p69 = por %p67, %p68
      %p71 = scmp.ne.s32.totalorder %s54, %s70
      %p72 = scmp.eq.s32.totalorder %s20, 0
      %p73 = por %p71, %p72
      %s75 = sadd.s32 %s74, 1
      %p78 = scmp.eq.s32.totalorder %s14, 1
      %p79 = scmp.ne.s32.totalorder %s74, %s76
      %p80 = scmp.eq.s32.totalorder %s14, 0
      %p81 = por %p79, %p80
      %p82 = scmp.ne.s32.totalorder %s74, %s76
      %p83 = scmp.eq.s32.totalorder %s19, 1
      %p84 = por %p82, %p83
      %p85 = scmp.ne.s32.totalorder %s76, %s77
      %p86 = scmp.eq.s32.totalorder %s19, 0
      %p87 = por %p85, %p86
      %p88 = scmp.ne.s32.totalorder %s76, %s77
      %p89 = scmp.eq.s32.totalorder %s20, 1
      %p90 = por %p88, %p89
      %p92 = scmp.ne.s32.totalorder %s77, %s91
      %p93 = scmp.eq.s32.totalorder %s20, 0
      %p94 = por %p92, %p93
      %s96 = sadd.s32 %s95, 1
      %p99 = scmp.eq.s32.totalorder %s14, 1
      %p100 = scmp.ne.s32.totalorder %s95, %s97
      %p101 = scmp.eq.s32.totalorder %s14, 0
      %p102 = por %p100, %p101
      %p103 = scmp.ne.s32.totalorder %s95, %s97
      %p104 = scmp.eq.s32.totalorder %s19, 1
      %p105 = por %p103, %p104
      %p106 = scmp.ne.s32.totalorder %s97, %s98
      %p107 = scmp.eq.s32.totalorder %s19, 0
      %p108 = por %p106, %p107
      %p109 = scmp.ne.s32.totalorder %s97, %s98
      %p110 = scmp.eq.s32.totalorder %s20, 1
      %p111 = por %p109, %p110
      %p113 = scmp.ne.s32.totalorder %s98, %s112
      %p114 = scmp.eq.s32.totalorder %s20, 0
      %p115 = por %p113, %p114
      %s116 = ssub.s32 %s14, %s21
      %p117 = scmp.eq.s32.totalorder %s116, 0
      %s119 = sadd.s32 %s118, 1
      %s120 = scalar_select %p117, %s118, %s119
      %p123 = pneg %p117
      %p124 = scmp.eq.s32.totalorder %s14, 1
      %p125 = por %p123, %p124
      %p126 = scmp.ne.s32.totalorder %s118, %s121
      %p127 = scmp.eq.s32.totalorder %s14, 0
      %p128 = por %p126, %p127
      %p129 = scmp.ne.s32.totalorder %s118, %s121
      %p130 = scmp.eq.s32.totalorder %s19, 1
      %p131 = por %p129, %p130
      %p132 = scmp.ne.s32.totalorder %s121, %s122
      %p133 = scmp.eq.s32.totalorder %s19, 0
      %p134 = por %p132, %p133
      %p135 = scmp.ne.s32.totalorder %s121, %s122
      %p136 = scmp.eq.s32.totalorder %s20, 1
      %p137 = por %p135, %p136
      %p139 = scmp.ne.s32.totalorder %s122, %s138
      %p140 = scmp.eq.s32.totalorder %s20, 0
      %p141 = por %p139, %p140
      %p142 = scmp.le.s32.totalorder 1, %s14
      %p143 = scmp.lt.s32.totalorder %s14, 3
      %p144 = pnand %p142, %p143
      %p145 = pneg %p144
      // Predicated region
      $region9: #{tpu_custom_call.1} parent=5 // pred_check
        _
      $region10: #{tpu_custom_call.1} parent=5 // pred_check_branch
        %147 = sbr.rel (%p144) target = $region12
      $region11: #{tpu_custom_call.1} parent=5 // pred_region
        %s148 = ssub.s32 %s14, 1
        // Predicated region
        $region13: #{tpu_custom_call.1} parent=11 // pred_check
          %p149 = pneg %p87
        $region14: #{tpu_custom_call.1} parent=11 // pred_check_branch
          %151 = sbr.rel (%p149) target = $region16
        $region15: #{tpu_custom_call.1} parent=11 // pred_region
          %s153 = ssub.s32 1792, 1792
          %154 = vsyncadd [#allocation3], %s153
          %s155 = sshll.u32 [#allocation2], 4
          %s156 = int_to_ptr.vmem [resolvable:$true] %s155
          %161 = dma.hbm_to_vmem [thread:$0]  %s2, 1792, %s156, [#allocation3], 64, 64, 4
        $region16: #{tpu_custom_call.1} parent=11 // pred_fallthru
          _
        // Predicated region
        $region17: #{tpu_custom_call.1} parent=11 // pred_check
          %p162 = pneg %p108
        $region18: #{tpu_custom_call.1} parent=11 // pred_check_branch
          %164 = sbr.rel (%p162) target = $region20
        $region19: #{tpu_custom_call.1} parent=11 // pred_region
          _
        $region20: #{tpu_custom_call.1} parent=11 // pred_fallthru
          _
      $region12: #{tpu_custom_call.1} parent=5 // pred_fallthru
        _
      %p165 = scmp.lt.s32.totalorder %s14, 2
      // Predicated region
      $region21: #{tpu_custom_call.1} parent=5 // pred_check
        %p166 = pneg %p165
      $region22: #{tpu_custom_call.1} parent=5 // pred_check_branch
        %168 = sbr.rel (%p166) target = $region24
      $region23: #{tpu_custom_call.1} parent=5 // pred_region
        // Predicated region
        $region25: #{tpu_custom_call.1} parent=23 // pred_check
          %p169 = pneg %p34
        $region26: #{tpu_custom_call.1} parent=23 // pred_check_branch
          %171 = sbr.rel (%p169) target = $region28
        $region27: #{tpu_custom_call.1} parent=23 // pred_region
          %p172 = scmp.lt.s32.totalorder %s14, 1
          %s173 = scalar_select %p172, %s14, 1
          %s174 = smul.addr %s173, 4
          %s175 = scalar_lea.vmem %s0, %s174
        $region28: #{tpu_custom_call.1} parent=23 // pred_fallthru
          _
        // Predicated region
        $region29: #{tpu_custom_call.1} parent=23 // pred_check
          %p176 = pneg %p60
        $region30: #{tpu_custom_call.1} parent=23 // pred_check_branch
          %178 = sbr.rel (%p176) target = $region32
        $region31: #{tpu_custom_call.1} parent=23 // pred_region
          %p179 = scmp.lt.s32.totalorder %s14, 1
          %s180 = scalar_select %p179, %s14, 1
          %s181 = smul.addr %s180, 8
          %s182 = scalar_lea.vmem %s1, %s181
        $region32: #{tpu_custom_call.1} parent=23 // pred_fallthru
          _
      $region24: #{tpu_custom_call.1} parent=5 // pred_fallthru
        _
      %p183 = scmp.le.s32.totalorder 1, %s14
      %p184 = scmp.lt.s32.totalorder %s14, 3
      %p185 = pnand %p183, %p184
      %p186 = pneg %p185
      // Predicated region
      $region33: #{tpu_custom_call.1} parent=5 // pred_check
        _
      $region34: #{tpu_custom_call.1} parent=5 // pred_check_branch
        %188 = sbr.rel (%p185) target = $region36
      $region35: #{tpu_custom_call.1} parent=5 // pred_region
        %s189 = ssub.s32 %s14, 1
        // Predicated region
        $region37: #{tpu_custom_call.1} parent=35 // pred_check
          %p190 = pneg %p87
        $region38: #{tpu_custom_call.1} parent=35 // pred_check_branch
          %192 = sbr.rel (%p190) target = $region40
        $region39: #{tpu_custom_call.1} parent=35 // pred_region
          %193 = dma.done [#allocation3], 1792
        $region40: #{tpu_custom_call.1} parent=35 // pred_fallthru
          _
        %p194 = scmp.lt.s32.totalorder %s19, 1
        %s195 = scalar_select %p194, %s19, 1
        %s196 = smul.addr %s195, 4
        %s197 = scalar_lea.vmem %s0, %s196
        %p198 = pneg %p40
        %p199 = pneg %p37
        %p200 = scmp.lt.s32.totalorder %s19, 1
        %s201 = scalar_select %p200, %s19, 1
        %s202 = smul.addr %s201, 8
        %s203 = scalar_lea.vmem %s1, %s202
        %p204 = pneg %p66
        %p205 = pneg %p63
        %p206 = pneg %p87
        %p207 = pneg %p84
        %p208 = pneg %p108
        %p209 = pneg %p105
        %p210 = pneg %p134
        %p211 = pneg %p131
        %s212 = sand.u32 %s121, 1
        %s213 = scalar_lea.sflag [#allocation4], %s212
        %s214 = sand.u32 %s121, 1
        %s215 = smul.addr %s214, 8
        %s216 = scalar_lea.vmem [#allocation5], %s215
        %p217 = scmp.lt.s32.totalorder %s19, 1
        %s218 = scalar_select %p217, %s19, 1
        %s219 = smul.addr %s218, 4
        %s220 = scalar_lea.vmem %s0, %s219
        %p221 = scmp.lt.s32.totalorder %s19, 1
        %s222 = scalar_select %p221, %s19, 1
        %s223 = smul.addr %s222, 8
        %s224 = scalar_lea.vmem %s1, %s223
        %v226 = vld [vmem:[%s3] sm:$0xff]
        %v227 = vld [vmem:[%s220] sm:$0xf]
        %v228 = vld [vmem:[#allocation2 + $0x10] sm:$0xf]
        %v229 = vlaneseq
        %v230 = vshrl.u32 %v229, 7
        %v231 = vsub.s32 0, %v230
        %v232 = vrot.slane %v226, %v231
        %vm233 = vcmask 64512
        %v235 = vsel %vm233, %v227, 0
        %vm237 = vcmask 1043456
        %v239 = vsel %vm237, %v228, 0
        %241 = vmatprep.subr.bf16.mxu0 0
        %242 = vmatpush1.bf16.msra.mxu0 0
        %243 = vmatprep.subr.bf16.mxu0 0
        %244 = vmatpush1.bf16.msra.mxu0 0
        %245 = vmatprep.subr.bf16.mxu0 0
        %246 = vmatpush1.bf16.msra.mxu0 0
        %247 = vmatprep.subr.bf16.mxu0 0
        %248 = vmatpush1.bf16.msra.mxu0 0
        %249 = vmatprep.subr.bf16.mxu0 0
        %250 = vmatpush1.bf16.msra.mxu0 0
        %251 = vmatprep.subr.bf16.mxu0 0
        %252 = vmatpush1.bf16.msra.mxu0 0
        %253 = vmatprep.subr.bf16.mxu0 0
        %254 = vmatpush1.bf16.msra.mxu0 0
        %255 = vmatprep.subr.bf16.mxu0 0
        %256 = vmatpush1.bf16.msra.mxu0 %v239
        %257 = vmatprep.subr.bf16.mxu0 0
        %258 = vmatpush2.bf16.msra.mxu0 0
        %259 = vmatprep.subr.bf16.mxu0 0
        %260 = vmatpush2.bf16.msra.mxu0 0
        %261 = vmatprep.subr.bf16.mxu0 0
        %262 = vmatpush2.bf16.msra.mxu0 0
        %263 = vmatprep.subr.bf16.mxu0 0
        %264 = vmatpush2.bf16.msra.mxu0 0
        %265 = vmatprep.subr.bf16.mxu0 0
        %266 = vmatpush2.bf16.msra.mxu0 0
        %267 = vmatprep.subr.bf16.mxu0 0
        %268 = vmatpush2.bf16.msra.mxu0 0
        %269 = vmatprep.subr.bf16.mxu0 0
        %270 = vmatpush2.bf16.msra.mxu0 0
        %271 = vmatprep.subr.bf16.mxu0 0
        %272 = vmatpush2.bf16.msra.mxu0 0
        %273 = vmatprep.mubr.bf16.mxu0 0
        %274 = vmatmul.mubr.bf16.gmra.mxu0 %v235
        %v275 = vpop.f32.mrf.mxu0
        %v276 = vadd.f32 %v232, %v275
        %v277 = vpop.f32.mrf.mxu0
        %v278 = vpop.f32.mrf.mxu0
        %v279 = vpop.f32.mrf.mxu0
        %280 = vdwg.mxu0
        %v281 = vmax.f32 %v276, 0.0
        %v282 = vpack.c.bf16 %v281, %v281
        %v283 = vld [vmem:[#allocation2 + $0x18] sm:$0xf]
        %v284 = vld [vmem:[#allocation2 + $0x1c] sm:$0xf]
        %v285 = vlaneseq
        %v286 = vshrl.u32 %v285, 7
        %v287 = vsub.s32 1, %v286
        %v288 = vrot.slane %v226, %v287
        %v291 = vunpack.c.l.b16 %v283
        %v292 = vunpack.c.l.b16 %v284
        %v293 = vpack.c.b16 %v292, %v291
        %vm295 = vcmask 130048
        %v297 = vsel %vm295, %v282, 0
        %299 = vmatprep.subr.bf16.mxu0 0
        %300 = vmatpush1.bf16.msra.mxu0 0
        %301 = vmatprep.subr.bf16.mxu0 0
        %302 = vmatpush1.bf16.msra.mxu0 0
        %303 = vmatprep.subr.bf16.mxu0 0
        %304 = vmatpush1.bf16.msra.mxu0 0
        %305 = vmatprep.subr.bf16.mxu0 0
        %306 = vmatpush1.bf16.msra.mxu0 0
        %307 = vmatprep.subr.bf16.mxu0 0
        %308 = vmatpush1.bf16.msra.mxu0 0
        %309 = vmatprep.subr.bf16.mxu0 0
        %310 = vmatpush1.bf16.msra.mxu0 0
        %311 = vmatprep.subr.bf16.mxu0 0
        %312 = vmatpush1.bf16.msra.mxu0 0
        %313 = vmatprep.subr.bf16.mxu0 0
        %314 = vmatpush1.bf16.msra.mxu0 %v293
        %315 = vmatprep.subr.bf16.mxu0 0
        %316 = vmatpush2.bf16.msra.mxu0 0
        %317 = vmatprep.subr.bf16.mxu0 0
        %318 = vmatpush2.bf16.msra.mxu0 0
        %319 = vmatprep.subr.bf16.mxu0 0
        %320 = vmatpush2.bf16.msra.mxu0 0
        %321 = vmatprep.subr.bf16.mxu0 0
        %322 = vmatpush2.bf16.msra.mxu0 0
        %323 = vmatprep.subr.bf16.mxu0 0
        %324 = vmatpush2.bf16.msra.mxu0 0
        %325 = vmatprep.subr.bf16.mxu0 0
        %326 = vmatpush2.bf16.msra.mxu0 0
        %327 = vmatprep.subr.bf16.mxu0 0
        %328 = vmatpush2.bf16.msra.mxu0 0
        %329 = vmatprep.subr.bf16.mxu0 0
        %330 = vmatpush2.bf16.msra.mxu0 0
        %331 = vmatprep.mubr.bf16.mxu0 0
        %332 = vmatmul.mubr.bf16.gmra.mxu0 %v297
        %v333 = vpop.f32.mrf.mxu0
        %v334 = vadd.f32 %v288, %v333
        %v335 = vpop.f32.mrf.mxu0
        %v336 = vpop.f32.mrf.mxu0
        %v337 = vpop.f32.mrf.mxu0
        %338 = vdwg.mxu0
        %v339 = vmax.f32 %v334, 0.0
        %v340 = vpack.c.bf16 %v339, %v339
        %v341 = vld [vmem:[%s224] sm:$0xff]
        %v342 = vlaneseq
        %v343 = vand.u32 %v342, 127
        %344 = vset.pattern.permute.xlu0 0
        %345 = vperm.xlu0 %344, %v341
        %v346 = vpop.permute.xlu0 %345
        %vm347 = vcmp.eq.s32.totalorder %v343, %v346
        %v348 = vsel %vm347, 1, 0
        %v349 = vcvt.s32.f32 %v348
        %v350 = vpack.c.bf16 %v349, %v349
        %v351 = vld [vmem:[#allocation2] sm:$0xf]
        %v352 = vld [vmem:[#allocation2 + $0x4] sm:$0xf]
        %v353 = vld [vmem:[#allocation2 + $0x8] sm:$0xf]
        %v354 = vld [vmem:[#allocation2 + $0xc] sm:$0xf]
        %v359 = vunpack.c.l.b16 %v351
        %v360 = vunpack.c.l.b16 %v352
        %v361 = vunpack.c.l.b16 %v353
        %v362 = vunpack.c.l.b16 %v354
        %v363 = vpack.c.b16 %v360, %v359
        %v364 = vpack.c.b16 %v362, %v361
        %vm367 = vcmask 261120
        %v369 = vsel %vm367, %v350, 0
        %371 = vmatprep.subr.bf16.mxu0 0
        %372 = vmatpush1.bf16.msra.mxu0 0
        %373 = vmatprep.subr.bf16.mxu0 0
        %374 = vmatpush1.bf16.msra.mxu0 0
        %375 = vmatprep.subr.bf16.mxu0 0
        %376 = vmatpush1.bf16.msra.mxu0 0
        %377 = vmatprep.subr.bf16.mxu0 0
        %378 = vmatpush1.bf16.msra.mxu0 0
        %379 = vmatprep.subr.bf16.mxu0 0
        %380 = vmatpush1.bf16.msra.mxu0 0
        %381 = vmatprep.subr.bf16.mxu0 0
        %382 = vmatpush1.bf16.msra.mxu0 0
        %383 = vmatprep.subr.bf16.mxu0 0
        %384 = vmatpush1.bf16.msra.mxu0 %v364
        %385 = vmatprep.subr.bf16.mxu0 0
        %386 = vmatpush1.bf16.msra.mxu0 %v363
        %387 = vmatprep.subr.bf16.mxu0 0
        %388 = vmatpush2.bf16.msra.mxu0 0
        %389 = vmatprep.subr.bf16.mxu0 0
        %390 = vmatpush2.bf16.msra.mxu0 0
        %391 = vmatprep.subr.bf16.mxu0 0
        %392 = vmatpush2.bf16.msra.mxu0 0
        %393 = vmatprep.subr.bf16.mxu0 0
        %394 = vmatpush2.bf16.msra.mxu0 0
        %395 = vmatprep.subr.bf16.mxu0 0
        %396 = vmatpush2.bf16.msra.mxu0 0
        %397 = vmatprep.subr.bf16.mxu0 0
        %398 = vmatpush2.bf16.msra.mxu0 0
        %399 = vmatprep.subr.bf16.mxu0 0
        %400 = vmatpush2.bf16.msra.mxu0 0
        %401 = vmatprep.subr.bf16.mxu0 0
        %402 = vmatpush2.bf16.msra.mxu0 0
        %403 = vmatprep.mubr.bf16.mxu0 0
        %404 = vmatmul.mubr.bf16.gmra.mxu0 %v369
        %v405 = vpop.f32.mrf.mxu0
        %v406 = vadd.f32 0.0, %v405
        %v407 = vpop.f32.mrf.mxu0
        %v408 = vpop.f32.mrf.mxu0
        %v409 = vpop.f32.mrf.mxu0
        %410 = vdwg.mxu0
        %v411 = vunpack.c.l.bf16 %v340
        %v412 = vadd.f32 %v411, %v406
        %v413 = vpack.c.bf16 %v412, %v412
        %v414 = vld [vmem:[#allocation2 + $0x20] sm:$0xf]
        %v415 = vld [vmem:[#allocation2 + $0x24] sm:$0xf]
        %v416 = vld [vmem:[#allocation2 + $0x28] sm:$0xf]
        %v417 = vld [vmem:[#allocation2 + $0x2c] sm:$0xf]
        %v418 = vlaneseq
        %v419 = vshrl.u32 %v418, 7
        %v420 = vsub.s32 2, %v419
        %v421 = vrot.slane %v226, %v420
        %v426 = vunpack.c.l.b16 %v414
        %v427 = vunpack.c.l.b16 %v415
        %v428 = vunpack.c.l.b16 %v416
        %v429 = vunpack.c.l.b16 %v417
        %v430 = vpack.c.b16 %v427, %v426
        %v431 = vpack.c.b16 %v429, %v428
        %v435 = vsel %vm367, %v413, 0
        %437 = vmatprep.subr.bf16.mxu0 0
        %438 = vmatpush1.bf16.msra.mxu0 0
        %439 = vmatprep.subr.bf16.mxu0 0
        %440 = vmatpush1.bf16.msra.mxu0 0
        %441 = vmatprep.subr.bf16.mxu0 0
        %442 = vmatpush1.bf16.msra.mxu0 0
        %443 = vmatprep.subr.bf16.mxu0 0
        %444 = vmatpush1.bf16.msra.mxu0 0
        %445 = vmatprep.subr.bf16.mxu0 0
        %446 = vmatpush1.bf16.msra.mxu0 0
        %447 = vmatprep.subr.bf16.mxu0 0
        %448 = vmatpush1.bf16.msra.mxu0 0
        %449 = vmatprep.subr.bf16.mxu0 0
        %450 = vmatpush1.bf16.msra.mxu0 %v431
        %451 = vmatprep.subr.bf16.mxu0 0
        %452 = vmatpush1.bf16.msra.mxu0 %v430
        %453 = vmatprep.subr.bf16.mxu0 0
        %454 = vmatpush2.bf16.msra.mxu0 0
        %455 = vmatprep.subr.bf16.mxu0 0
        %456 = vmatpush2.bf16.msra.mxu0 0
        %457 = vmatprep.subr.bf16.mxu0 0
        %458 = vmatpush2.bf16.msra.mxu0 0
        %459 = vmatprep.subr.bf16.mxu0 0
        %460 = vmatpush2.bf16.msra.mxu0 0
        %461 = vmatprep.subr.bf16.mxu0 0
        %462 = vmatpush2.bf16.msra.mxu0 0
        %463 = vmatprep.subr.bf16.mxu0 0
        %464 = vmatpush2.bf16.msra.mxu0 0
        %465 = vmatprep.subr.bf16.mxu0 0
        %466 = vmatpush2.bf16.msra.mxu0 0
        %467 = vmatprep.subr.bf16.mxu0 0
        %468 = vmatpush2.bf16.msra.mxu0 0
        %469 = vmatprep.mubr.bf16.mxu0 0
        %470 = vmatmul.mubr.bf16.gmra.mxu0 %v435
        %v471 = vpop.f32.mrf.mxu0
        %v472 = vadd.f32 %v421, %v471
        %v473 = vpop.f32.mrf.mxu0
        %v474 = vpop.f32.mrf.mxu0
        %v475 = vpop.f32.mrf.mxu0
        %476 = vdwg.mxu0
        %v477 = vpack.c.bf16 %v472, %v472
        %v478 = vld [vmem:[#allocation2 + $0x30] sm:$0xf]
        %v479 = vld [vmem:[#allocation2 + $0x34] sm:$0xf]
        %v480 = vld [vmem:[#allocation2 + $0x38] sm:$0xf]
        %v481 = vld [vmem:[#allocation2 + $0x3c] sm:$0xf]
        %v482 = vlaneseq
        %v483 = vshrl.u32 %v482, 7
        %v484 = vsub.s32 3, %v483
        %v485 = vrot.slane %v226, %v484
        %v490 = vunpack.c.l.b16 %v478
        %v491 = vunpack.c.l.b16 %v479
        %v492 = vunpack.c.l.b16 %v480
        %v493 = vunpack.c.l.b16 %v481
        %v494 = vpack.c.b16 %v491, %v490
        %v495 = vpack.c.b16 %v493, %v492
        %v499 = vsel %vm367, %v477, 0
        %501 = vmatprep.subr.bf16.mxu0 0
        %502 = vmatpush1.bf16.msra.mxu0 0
        %503 = vmatprep.subr.bf16.mxu0 0
        %504 = vmatpush1.bf16.msra.mxu0 0
        %505 = vmatprep.subr.bf16.mxu0 0
        %506 = vmatpush1.bf16.msra.mxu0 0
        %507 = vmatprep.subr.bf16.mxu0 0
        %508 = vmatpush1.bf16.msra.mxu0 0
        %509 = vmatprep.subr.bf16.mxu0 0
        %510 = vmatpush1.bf16.msra.mxu0 0
        %511 = vmatprep.subr.bf16.mxu0 0
        %512 = vmatpush1.bf16.msra.mxu0 0
        %513 = vmatprep.subr.bf16.mxu0 0
        %514 = vmatpush1.bf16.msra.mxu0 %v495
        %515 = vmatprep.subr.bf16.mxu0 0
        %516 = vmatpush1.bf16.msra.mxu0 %v494
        %517 = vmatprep.subr.bf16.mxu0 0
        %518 = vmatpush2.bf16.msra.mxu0 0
        %519 = vmatprep.subr.bf16.mxu0 0
        %520 = vmatpush2.bf16.msra.mxu0 0
        %521 = vmatprep.subr.bf16.mxu0 0
        %522 = vmatpush2.bf16.msra.mxu0 0
        %523 = vmatprep.subr.bf16.mxu0 0
        %524 = vmatpush2.bf16.msra.mxu0 0
        %525 = vmatprep.subr.bf16.mxu0 0
        %526 = vmatpush2.bf16.msra.mxu0 0
        %527 = vmatprep.subr.bf16.mxu0 0
        %528 = vmatpush2.bf16.msra.mxu0 0
        %529 = vmatprep.subr.bf16.mxu0 0
        %530 = vmatpush2.bf16.msra.mxu0 0
        %531 = vmatprep.subr.bf16.mxu0 0
        %532 = vmatpush2.bf16.msra.mxu0 0
        %533 = vmatprep.mubr.bf16.mxu0 0
        %534 = vmatmul.mubr.bf16.gmra.mxu0 %v499
        %v535 = vpop.f32.mrf.mxu0
        %v536 = vadd.f32 %v485, %v535
        %v537 = vpop.f32.mrf.mxu0
        %v538 = vpop.f32.mrf.mxu0
        %v539 = vpop.f32.mrf.mxu0
        %540 = vdwg.mxu0
        %v541 = vmax.f32 %v536, 0.0
        %v542 = vpack.c.bf16 %v541, %v541
        %v543 = vld [vmem:[#allocation2 + $0x40] sm:$0xf]
        %v544 = vld [vmem:[#allocation2 + $0x44] sm:$0xf]
        %v545 = vld [vmem:[#allocation2 + $0x48] sm:$0xf]
        %v546 = vld [vmem:[#allocation2 + $0x4c] sm:$0xf]
        %v547 = vld [vmem:[#allocation2 + $0x50] sm:$0xf]
        %v548 = vlaneseq
        %v549 = vshrl.u32 %v548, 7
        %v550 = vsub.s32 4, %v549
        %v551 = vrot.slane %v226, %v550
        %v557 = vunpack.c.l.b16 %v543
        %v558 = vunpack.c.l.b16 %v544
        %v559 = vunpack.c.l.b16 %v545
        %v560 = vunpack.c.l.b16 %v546
        %v561 = vunpack.c.l.b16 %v547
        %v562 = vpack.c.b16 %v558, %v557
        %v563 = vpack.c.b16 %v560, %v559
        %v564 = vpack.c.b16 %v561, %v561
        %vm567 = vcmask 326656
        %v569 = vsel %vm567, %v542, 0
        %v572 = vsel %vm237, %v564, 0
        %574 = vmatprep.subr.bf16.mxu0 0
        %575 = vmatpush1.bf16.msra.mxu0 0
        %576 = vmatprep.subr.bf16.mxu0 0
        %577 = vmatpush1.bf16.msra.mxu0 0
        %578 = vmatprep.subr.bf16.mxu0 0
        %579 = vmatpush1.bf16.msra.mxu0 0
        %580 = vmatprep.subr.bf16.mxu0 0
        %581 = vmatpush1.bf16.msra.mxu0 0
        %582 = vmatprep.subr.bf16.mxu0 0
        %583 = vmatpush1.bf16.msra.mxu0 0
        %584 = vmatprep.subr.bf16.mxu0 0
        %585 = vmatpush1.bf16.msra.mxu0 %v572
        %586 = vmatprep.subr.bf16.mxu0 0
        %587 = vmatpush1.bf16.msra.mxu0 %v563
        %588 = vmatprep.subr.bf16.mxu0 0
        %589 = vmatpush1.bf16.msra.mxu0 %v562
        %590 = vmatprep.subr.bf16.mxu0 0
        %591 = vmatpush2.bf16.msra.mxu0 0
        %592 = vmatprep.subr.bf16.mxu0 0
        %593 = vmatpush2.bf16.msra.mxu0 0
        %594 = vmatprep.subr.bf16.mxu0 0
        %595 = vmatpush2.bf16.msra.mxu0 0
        %596 = vmatprep.subr.bf16.mxu0 0
        %597 = vmatpush2.bf16.msra.mxu0 0
        %598 = vmatprep.subr.bf16.mxu0 0
        %599 = vmatpush2.bf16.msra.mxu0 0
        %600 = vmatprep.subr.bf16.mxu0 0
        %601 = vmatpush2.bf16.msra.mxu0 0
        %602 = vmatprep.subr.bf16.mxu0 0
        %603 = vmatpush2.bf16.msra.mxu0 0
        %604 = vmatprep.subr.bf16.mxu0 0
        %605 = vmatpush2.bf16.msra.mxu0 0
        %606 = vmatprep.mubr.bf16.mxu0 0
        %607 = vmatmul.mubr.bf16.gmra.mxu0 %v569
        %v608 = vpop.f32.mrf.mxu0
        %v609 = vadd.f32 %v551, %v608
        %v610 = vpop.f32.mrf.mxu0
        %v611 = vpop.f32.mrf.mxu0
        %v612 = vpop.f32.mrf.mxu0
        %613 = vdwg.mxu0
        %v614 = vmax.f32 %v609, 0.0
        %v615 = vpack.c.bf16 %v614, %v614
        %v616 = vld [vmem:[#allocation2 + $0x58] sm:$0xf]
        %v617 = vld [vmem:[#allocation2 + $0x5c] sm:$0xf]
        %v618 = vld [vmem:[#allocation2 + $0x60] sm:$0xf]
        %v619 = vld [vmem:[#allocation2 + $0x64] sm:$0xf]
        %v620 = vld [vmem:[#allocation2 + $0x68] sm:$0xf]
        %v621 = vld [vmem:[#allocation2 + $0x6c] sm:$0xf]
        %v622 = vlaneseq
        %v623 = vshrl.u32 %v622, 7
        %v624 = vsub.s32 5, %v623
        %v625 = vrot.slane %v226, %v624
        %v632 = vunpack.c.l.b16 %v616
        %v633 = vunpack.c.l.b16 %v617
        %v634 = vunpack.c.l.b16 %v618
        %v635 = vunpack.c.l.b16 %v619
        %v636 = vunpack.c.l.b16 %v620
        %v637 = vunpack.c.l.b16 %v621
        %v638 = vpack.c.b16 %v633, %v632
        %v639 = vpack.c.b16 %v635, %v634
        %v640 = vpack.c.b16 %v637, %v636
        %vm644 = vcmask 392192
        %v646 = vsel %vm644, %v615, 0
        %648 = vmatprep.subr.bf16.mxu0 0
        %649 = vmatpush1.bf16.msra.mxu0 0
        %650 = vmatprep.subr.bf16.mxu0 0
        %651 = vmatpush1.bf16.msra.mxu0 0
        %652 = vmatprep.subr.bf16.mxu0 0
        %653 = vmatpush1.bf16.msra.mxu0 0
        %654 = vmatprep.subr.bf16.mxu0 0
        %655 = vmatpush1.bf16.msra.mxu0 0
        %656 = vmatprep.subr.bf16.mxu0 0
        %657 = vmatpush1.bf16.msra.mxu0 0
        %658 = vmatprep.subr.bf16.mxu0 0
        %659 = vmatpush1.bf16.msra.mxu0 %v640
        %660 = vmatprep.subr.bf16.mxu0 0
        %661 = vmatpush1.bf16.msra.mxu0 %v639
        %662 = vmatprep.subr.bf16.mxu0 0
        %663 = vmatpush1.bf16.msra.mxu0 %v638
        %664 = vmatprep.subr.bf16.mxu0 0
        %665 = vmatpush2.bf16.msra.mxu0 0
        %666 = vmatprep.subr.bf16.mxu0 0
        %667 = vmatpush2.bf16.msra.mxu0 0
        %668 = vmatprep.subr.bf16.mxu0 0
        %669 = vmatpush2.bf16.msra.mxu0 0
        %670 = vmatprep.subr.bf16.mxu0 0
        %671 = vmatpush2.bf16.msra.mxu0 0
        %672 = vmatprep.subr.bf16.mxu0 0
        %673 = vmatpush2.bf16.msra.mxu0 0
        %674 = vmatprep.subr.bf16.mxu0 0
        %675 = vmatpush2.bf16.msra.mxu0 0
        %676 = vmatprep.subr.bf16.mxu0 0
        %677 = vmatpush2.bf16.msra.mxu0 0
        %678 = vmatprep.subr.bf16.mxu0 0
        %679 = vmatpush2.bf16.msra.mxu0 0
        %680 = vmatprep.mubr.bf16.mxu0 0
        %681 = vmatmul.mubr.bf16.gmra.mxu0 %v646
        %v682 = vpop.f32.mrf.mxu0
        %v683 = vadd.f32 %v625, %v682
        %v684 = vpop.f32.mrf.mxu0
        %v685 = vpop.f32.mrf.mxu0
        %v686 = vpop.f32.mrf.mxu0
        %687 = vdwg.mxu0
        %v688 = vmax.f32 %v683, 0.0
        %v689 = vpack.c.bf16 %v688, %v688
        %v690 = vunpack.c.l.bf16 %v689
        %691 = vst.msk [vmem:[%s216] sm:$0xff] %vm295, %v690
        %s692 = sand.u32 %s121, 1
        %s693 = scalar_lea.sflag [#allocation4], %s692
        %s694 = sand.u32 %s121, 1
        %s695 = smul.addr %s694, 8
        %s696 = scalar_lea.vmem [#allocation5], %s695
        // Predicated region
        $region41: #{tpu_custom_call.1} parent=35 // pred_check
          %p697 = pneg %p131
        $region42: #{tpu_custom_call.1} parent=35 // pred_check_branch
          %699 = sbr.rel (%p697) target = $region44
        $region43: #{tpu_custom_call.1} parent=35 // pred_region
          %s701 = ssub.s32 128, 128
          %702 = vsyncadd %s693, %s701
          %s703 = smul.addr %s19, 128
          %s704 = scalar_lea.hbm %s4, %s703
          %s706 = sshll.u32 %s696, 4
          %s707 = int_to_ptr.vmem [resolvable:$true] %s706
          %709 = dma.vmem_to_hbm [thread:$0]  %s707, 128, %s704, %s693
        $region44: #{tpu_custom_call.1} parent=35 // pred_fallthru
          _
      $region36: #{tpu_custom_call.1} parent=5 // pred_fallthru
        _
      %p710 = scmp.le.s32.totalorder 2, %s14
      // Predicated region
      $region45: #{tpu_custom_call.1} parent=5 // pred_check
        %p711 = pneg %p710
      $region46: #{tpu_custom_call.1} parent=5 // pred_check_branch
        %713 = sbr.rel (%p711) target = $region48
      $region47: #{tpu_custom_call.1} parent=5 // pred_region
        %s714 = ssub.s32 %s14, 2
        // Predicated region
        $region49: #{tpu_custom_call.1} parent=47 // pred_check
          %p715 = pneg %p137
        $region50: #{tpu_custom_call.1} parent=47 // pred_check_branch
          %717 = sbr.rel (%p715) target = $region52
        $region51: #{tpu_custom_call.1} parent=47 // pred_region
          %s718 = sand.u32 %s122, 1
          %s719 = scalar_lea.sflag [#allocation4], %s718
          %s720 = sand.u32 %s122, 1
          %s721 = smul.addr %s720, 8
          %s722 = scalar_lea.vmem [#allocation5], %s721
          %723 = dma.done %s719, 128
        $region52: #{tpu_custom_call.1} parent=47 // pred_fallthru
          _
      $region48: #{tpu_custom_call.1} parent=5 // pred_fallthru
        _
    $region6: #{tpu_custom_call.1} parent=1 // loop_footer
      %s18 = sadd.s32 1, %s14
    $region7: #{tpu_custom_call.1} parent=1 // loop_footer_branch
      %13 = sbr.rel target = $region3
    $region8: #{tpu_custom_call.1} parent=1 // loop_exit
      _
    %724 = vsyncpa [#allocation3], 1
    %s725 = scalar_lea.sflag [#allocation3], 1
    %726 = vsyncpa %s725, 1
    %727 = vsyncpa [#allocation4], 1
    %s728 = scalar_lea.sflag [#allocation4], 1
    %729 = vsyncpa %s728, 1

</llo_original>
